<compile_context>
chip_gen: v7x
topology: tpu7x:2x2x1
jax: 0.10.0
libtpu: 0.0.40
codegen_flags: <defaults>
</compile_context>

<pallas_src>
import functools

import jax
import jax.numpy as jnp
from jax.experimental import pallas as pl
from jax.experimental.pallas import tpu as pltpu

_EPS = 1e-6  # matches torch F.pairwise_distance default eps


def _contrastive_loss_kernel(o1_ref, o2_ref, lab_ref, out_ref, *,
                             margin, batch_size, block_rows, tiles_per_shard,
                             num_tiles):
    s = pl.program_id(0)            # TensorCore shard ("parallel")
    i = pl.program_id(1)            # batch tile within the shard ("arbitrary")
    gt = s * tiles_per_shard + i    # global (unclamped) batch-tile index

    # Zero the resident per-shard accumulator block at the start of each shard.
    @pl.when(i == 0)
    def _():
        out_ref[...] = jnp.zeros_like(out_ref)

    # Native-dtype DMA; cast to f32 after the load so HBM traffic stays minimal.
    o1 = o1_ref[...].astype(jnp.float32)      # (TB, D)
    o2 = o2_ref[...].astype(jnp.float32)      # (TB, D)
    lab = lab_ref[...].astype(jnp.float32)    # (TB, 1)

    diff = o1 - o2 + _EPS                                   # torch eps semantics
    d2 = jnp.sum(diff * diff, axis=-1, keepdims=True)       # (TB, 1)
    d = jnp.sqrt(d2)                                        # for the margin branch
    contrib = lab * d2 + (1.0 - lab) * jnp.square(jnp.maximum(margin - d, 0.0))

    # Only the last real tile (and any fully out-of-range tile of the second
    # shard) can contain rows >= batch_size; every other tile accumulates
    # unmasked.
    @pl.when(gt < num_tiles - 1)
    def _():
        out_ref[...] += contrib

    @pl.when(gt >= num_tiles - 1)
    def _():
        row = gt * block_rows + jax.lax.broadcasted_iota(
            jnp.int32, (block_rows, 1), 0)
        out_ref[...] += jnp.where(row < batch_size, contrib, 0.0)


def _vmem_budgets():
    """(input_tile_budget_bytes, vmem_limit_cap_bytes), generation-aware."""
    try:
        cap = int(pltpu.get_tpu_info().vmem_capacity_bytes)
    except Exception:
        cap = 64 << 20                      # assume the smallest (v7x-class)
    if cap <= (80 << 20):                   # v7x: 64 MiB physical VMEM per TC
        return 28 << 20, 48 << 20
    return 44 << 20, 64 << 20               # v5e / v6e: 128 MiB physical VMEM


def contrastive_loss(output1, output2, label, margin=1.0, block_rows=None):
    """output1, output2: (B, D); label: (B,) or (B, 1). Returns scalar f32 loss."""
    output1 = jnp.asarray(output1)
    output2 = jnp.asarray(output2)
    assert output1.ndim == 2 and output1.shape == output2.shape
    B, D = output1.shape
    # Label is tiny (B x 1) — keep it f32; the bandwidth that matters is o1/o2.
    label = jnp.asarray(label, jnp.float32).reshape(B, 1)

    itemsize = output1.dtype.itemsize
    # Sublane packing: 8 rows for 32-bit, 16 for bf16, 32 for int8/fp8.
    row_align = 8 * max(1, 4 // max(1, itemsize))

    input_budget, vmem_cap = _vmem_budgets()
    # Per-batch-row VMEM cost of one pipeline stage, double-buffered:
    #   o1 + o2 tiles (native dtype), the lane-padded (TB, 1) f32 label tile
    #   (a (TB, 1) block really occupies TB * 128 lanes * 4 B in VMEM), plus
    #   the resident lane-padded (TB, 1) f32 output block (counted x2 for safety).
    lane_row = 128 * 4
    per_row = 2 * (2 * D * itemsize + lane_row) + 2 * lane_row

    if block_rows is None:
        tb = input_budget // per_row
        tb = max(row_align, min(16384, int(tb)))
    else:
        tb = max(row_align, int(block_rows))
    tb = max(row_align, (tb // row_align) * row_align)

    if tb >= B:
        tb = B                      # single full-array block (any B, no padding)
    num_tiles = -(-B // tb)         # cdiv(B, tb); ragged last tile handled by mask
    # Shard the batch reduction across the two TensorCores (v7x megacore);
    # harmless (just a sequential outer loop) on single-TC v5e/v6e.
    num_shards = 2 if num_tiles >= 2 else 1
    tiles_per_shard = -(-num_tiles // num_shards)
    last_tile = num_tiles - 1

    def in_map(s, i):
        # Clamp so the (rare) fully out-of-range tile of the last shard maps to
        # a valid block; its contribution is zeroed by the in-kernel row mask.
        return (jnp.minimum(s * tiles_per_shard + i, last_tile), 0)

    vmem_limit = int(min(vmem_cap, max(16 << 20, per_row * tb + (2 << 20))))

    kernel = functools.partial(
        _contrastive_loss_kernel,
        margin=float(margin), batch_size=B, block_rows=tb,
        tiles_per_shard=tiles_per_shard, num_tiles=num_tiles)

    partial_sums = pl.pallas_call(
        kernel,
        out_shape=jax.ShapeDtypeStruct((num_shards * tb, 1), jnp.float32),
        grid_spec=pltpu.PrefetchScalarGridSpec(
            num_scalar_prefetch=0,
            grid=(num_shards, tiles_per_shard),
            in_specs=[
                pl.BlockSpec((tb, D), in_map),
                pl.BlockSpec((tb, D), in_map),
                pl.BlockSpec((tb, 1), in_map),
            ],
            # Per-shard resident accumulator block (constant along the inner
            # reduction axis).
            out_specs=pl.BlockSpec((tb, 1), lambda s, i: (s, 0)),
        ),
        compiler_params=pltpu.CompilerParams(
            dimension_semantics=("parallel", "arbitrary"),
            vmem_limit_bytes=vmem_limit,
        ),
    )(output1, output2, label)

    # Tiny XLA reduce over per-row partial sums; masked/padded rows are zero.
    return jnp.sum(partial_sums) / B


def _reference(output1, output2, label, margin=1.0):
    o1 = jnp.asarray(output1, jnp.float32)
    o2 = jnp.asarray(output2, jnp.float32)
    lab = jnp.asarray(label, jnp.float32).reshape(o1.shape[0], 1)
    d = jnp.sqrt(jnp.sum(jnp.square(o1 - o2 + _EPS), axis=-1, keepdims=True))
    return jnp.mean(lab * jnp.square(d)
                    + (1.0 - lab) * jnp.square(jnp.maximum(margin - d, 0.0)))


if __name__ == "__main__":
    key = jax.random.PRNGKey(0)
    k1, k2, k3, k4, k5, k6 = jax.random.split(key, 6)

    # Small demo shape consistent with the module.
    B, D = 8, 32
    o1 = jax.random.normal(k1, (B, D), dtype=jnp.float32)
    o2 = jax.random.normal(k2, (B, D), dtype=jnp.float32)
    lab = jax.random.bernoulli(k3, 0.5, (B, 1)).astype(jnp.float32)

    loss = contrastive_loss(o1, o2, lab, margin=1.0)
    jax.block_until_ready(loss)
    ref = _reference(o1, o2, lab, margin=1.0)
    assert jnp.allclose(loss, ref, atol=1e-5, rtol=1e-5), (loss, ref)

    # Ragged batch with forced small tiles: exercises the 2-shard parallel axis,
    # the partial last tile, and the clamped fully-out-of-range tile (odd tile
    # count: cdiv(75, 16) = 5).
    B2, D2 = 75, 256
    o1b = jax.random.normal(k4, (B2, D2), dtype=jnp.float32)
    o2b = jax.random.normal(k5, (B2, D2), dtype=jnp.float32)
    labb = jax.random.bernoulli(k6, 0.5, (B2, 1)).astype(jnp.float32)

    loss2 = contrastive_loss(o1b, o2b, labb, margin=1.0, block_rows=16)
    jax.block_until_ready(loss2)
    ref2 = _reference(o1b, o2b, labb, margin=1.0)
    assert jnp.allclose(loss2, ref2, atol=1e-4, rtol=1e-4), (loss2, ref2)

    # Same ragged batch through the autotuned (single full-block, no padding) path.
    loss3 = contrastive_loss(o1b, o2b, labb, margin=1.0)
    jax.block_until_ready(loss3)
    assert jnp.allclose(loss3, ref2, atol=1e-4, rtol=1e-4), (loss3, ref2)

    print("KERNEL_OK")
</pallas_src>

<mosaic_0001>
module attributes {stable_mosaic.version = 11 : i64} {
  func.func @_contrastive_loss_kernel(%arg0: i32, %arg1: i32, %arg2: memref<8x32xf32, #tpu.memory_space<vmem>>, %arg3: memref<8x32xf32, #tpu.memory_space<vmem>>, %arg4: memref<8x1xf32, #tpu.memory_space<vmem>>, %arg5: memref<8x1xf32, #tpu.memory_space<vmem>>) attributes {dimension_semantics = [#tpu.dimension_semantics<parallel>, #tpu.dimension_semantics<arbitrary>], iteration_bounds = array<i64: 1, 1>, scalar_prefetch = 0 : i64, scratch_operands = 0 : i64, tpu.core_type = #tpu.core_type<tc>, window_params = [{transform_indices = @transform_0, window_bounds = array<i64: 8, 32>}, {transform_indices = @transform_1, window_bounds = array<i64: 8, 32>}, {transform_indices = @transform_2, window_bounds = array<i64: 8, 1>}, {transform_indices = @transform_3, window_bounds = array<i64: 8, 1>}]} {
    %c1_i32 = arith.constant 1 : i32
    %0 = arith.muli %arg0, %c1_i32 : i32
    %1 = arith.addi %0, %arg1 : i32
    %c0_i32 = arith.constant 0 : i32
    %2 = arith.cmpi eq, %arg1, %c0_i32 : i32
    %3 = arith.extui %2 : i1 to i32
    %c0_i32_0 = arith.constant 0 : i32
    %4 = arith.cmpi ne, %3, %c0_i32_0 : i32
    scf.if %4 {
      %cst_14 = arith.constant 0.000000e+00 : f32
      %31 = vector.broadcast %cst_14 : f32 to vector<8x1xf32>
      %c0_15 = arith.constant 0 : index
      %c0_16 = arith.constant 0 : index
      %32 = vector.load %arg5[%c0_15, %c0_16] : memref<8x1xf32, #tpu.memory_space<vmem>>, vector<8x1xf32>
      tpu.vector_store %arg5[%c0_15, %c0_16], %31 {strides = array<i32>} : memref<8x1xf32, #tpu.memory_space<vmem>>, vector<8x1xf32>,
    } else {
    }
    %c0 = arith.constant 0 : index
    %c0_1 = arith.constant 0 : index
    %5 = vector.load %arg2[%c0, %c0_1] : memref<8x32xf32, #tpu.memory_space<vmem>>, vector<8x32xf32>
    %c0_2 = arith.constant 0 : index
    %c0_3 = arith.constant 0 : index
    %6 = vector.load %arg3[%c0_2, %c0_3] : memref<8x32xf32, #tpu.memory_space<vmem>>, vector<8x32xf32>
    %c0_4 = arith.constant 0 : index
    %c0_5 = arith.constant 0 : index
    %7 = vector.load %arg4[%c0_4, %c0_5] : memref<8x1xf32, #tpu.memory_space<vmem>>, vector<8x1xf32>
    %8 = arith.subf %5, %6 : vector<8x32xf32>
    %cst = arith.constant 9.99999997E-7 : f32
    %9 = vector.broadcast %cst : f32 to vector<8x32xf32>
    %10 = arith.addf %8, %9 : vector<8x32xf32>
    %11 = arith.mulf %10, %10 : vector<8x32xf32>
    %cst_6 = arith.constant dense<0.000000e+00> : vector<8xf32>
    %12 = vector.multi_reduction <add>, %11, %cst_6 [1] : vector<8x32xf32> to vector<8xf32>
    %13 = vector.shape_cast %12 : vector<8xf32> to vector<8x1xf32>
    %14 = math.sqrt %13 : vector<8x1xf32>
    %15 = arith.mulf %7, %13 : vector<8x1xf32>
    %cst_7 = arith.constant 1.000000e+00 : f32
    %16 = vector.broadcast %cst_7 : f32 to vector<8x1xf32>
    %17 = arith.subf %16, %7 : vector<8x1xf32>
    %cst_8 = arith.constant 1.000000e+00 : f32
    %18 = vector.broadcast %cst_8 : f32 to vector<8x1xf32>
    %19 = arith.subf %18, %14 : vector<8x1xf32>
    %cst_9 = arith.constant 0.000000e+00 : f32
    %20 = vector.broadcast %cst_9 : f32 to vector<8x1xf32>
    %21 = arith.maximumf %19, %20 : vector<8x1xf32>
    %22 = arith.mulf %21, %21 : vector<8x1xf32>
    %23 = arith.mulf %17, %22 : vector<8x1xf32>
    %24 = arith.addf %15, %23 : vector<8x1xf32>
    %c0_i32_10 = arith.constant 0 : i32
    %25 = arith.cmpi slt, %1, %c0_i32_10 : i32
    %26 = arith.extui %25 : i1 to i32
    %c0_i32_11 = arith.constant 0 : i32
    %27 = arith.cmpi ne, %26, %c0_i32_11 : i32
    scf.if %27 {
      %c0_14 = arith.constant 0 : index
      %c0_15 = arith.constant 0 : index
      %31 = vector.load %arg5[%c0_14, %c0_15] : memref<8x1xf32, #tpu.memory_space<vmem>>, vector<8x1xf32>
      %32 = arith.addf %31, %24 : vector<8x1xf32>
      %c0_16 = arith.constant 0 : index
      %c0_17 = arith.constant 0 : index
      %33 = vector.load %arg5[%c0_16, %c0_17] : memref<8x1xf32, #tpu.memory_space<vmem>>, vector<8x1xf32>
      tpu.vector_store %arg5[%c0_16, %c0_17], %32 {strides = array<i32>} : memref<8x1xf32, #tpu.memory_space<vmem>>, vector<8x1xf32>,
    } else {
    }
    %c0_i32_12 = arith.constant 0 : i32
    %28 = arith.cmpi sge, %1, %c0_i32_12 : i32
    %29 = arith.extui %28 : i1 to i32
    %c0_i32_13 = arith.constant 0 : i32
    %30 = arith.cmpi ne, %29, %c0_i32_13 : i32
    scf.if %30 {
      %c8_i32 = arith.constant 8 : i32
      %31 = arith.muli %1, %c8_i32 : i32
      %32 = tpu.iota {dimensions = array<i32: 0>} : vector<8x1xi32>
      %33 = vector.broadcast %31 : i32 to vector<8x1xi32>
      %34 = arith.addi %33, %32 : vector<8x1xi32>
      %c0_14 = arith.constant 0 : index
      %c0_15 = arith.constant 0 : index
      %35 = vector.load %arg5[%c0_14, %c0_15] : memref<8x1xf32, #tpu.memory_space<vmem>>, vector<8x1xf32>
      %c8_i32_16 = arith.constant 8 : i32
      %36 = vector.broadcast %c8_i32_16 : i32 to vector<8x1xi32>
      %37 = arith.cmpi slt, %34, %36 : vector<8x1xi32>
      %cst_17 = arith.constant 0.000000e+00 : f32
      %38 = vector.broadcast %cst_17 : f32 to vector<8x1xf32>
      %39 = arith.select %37, %24, %38 : vector<8x1xi1>, vector<8x1xf32>
      %40 = arith.addf %35, %39 : vector<8x1xf32>
      %c0_18 = arith.constant 0 : index
      %c0_19 = arith.constant 0 : index
      %41 = vector.load %arg5[%c0_18, %c0_19] : memref<8x1xf32, #tpu.memory_space<vmem>>, vector<8x1xf32>
      tpu.vector_store %arg5[%c0_18, %c0_19], %40 {strides = array<i32>} : memref<8x1xf32, #tpu.memory_space<vmem>>, vector<8x1xf32>,
    } else {
    }
    return
  }
  func.func @transform_0(%arg0: i32, %arg1: i32) -> (i32, i32) {
    %c1_i32 = arith.constant 1 : i32
    %0 = arith.muli %arg0, %c1_i32 : i32
    %1 = arith.addi %0, %arg1 : i32
    %c0_i32 = arith.constant 0 : i32
    %2 = arith.minsi %1, %c0_i32 : i32
    %c0_i32_0 = arith.constant 0 : i32
    %c0_i32_1 = arith.constant 0 : i32
    return %2, %c0_i32_0 : i32, i32
  }
  func.func @transform_1(%arg0: i32, %arg1: i32) -> (i32, i32) {
    %c1_i32 = arith.constant 1 : i32
    %0 = arith.muli %arg0, %c1_i32 : i32
    %1 = arith.addi %0, %arg1 : i32
    %c0_i32 = arith.constant 0 : i32
    %2 = arith.minsi %1, %c0_i32 : i32
    %c0_i32_0 = arith.constant 0 : i32
    %c0_i32_1 = arith.constant 0 : i32
    return %2, %c0_i32_0 : i32, i32
  }
  func.func @transform_2(%arg0: i32, %arg1: i32) -> (i32, i32) {
    %c1_i32 = arith.constant 1 : i32
    %0 = arith.muli %arg0, %c1_i32 : i32
    %1 = arith.addi %0, %arg1 : i32
    %c0_i32 = arith.constant 0 : i32
    %2 = arith.minsi %1, %c0_i32 : i32
    %c0_i32_0 = arith.constant 0 : i32
    %c0_i32_1 = arith.constant 0 : i32
    return %2, %c0_i32_0 : i32, i32
  }
  func.func @transform_3(%arg0: i32, %arg1: i32) -> (i32, i32) {
    %c0_i32 = arith.constant 0 : i32
    %c0_i32_0 = arith.constant 0 : i32
    return %arg0, %c0_i32 : i32, i32
  }
}

</mosaic_0001>

<llo_original>
// kernel: tpu_custom_call.1
$region0: #{tpu_custom_call.1}
  #allocation0 [shape = 'u32[]', space=smem, size = 0x4, offset = 0x4, fixed_abs, tag = 'smem constant byte address 0x4 - core index']
  #allocation1 [shape = 'u32[144,128]{1,0:T(1,128)}', space=vmem, size = 0x12000, scoped, tag = 'internal scratch']
  %s0 = inlined_call_operand.vmem [shape: f32[8,32], index: 0, kind: input, shape index: {}]
  %s1 = inlined_call_operand.hbm [shape: f32[8,32], index: 1, kind: input, shape index: {}]
  %s2 = inlined_call_operand.vmem [shape: f32[8,1], index: 2, kind: input, shape index: {}]
  %s3 = inlined_call_operand.vmem [shape: f32[8,1], index: 3, kind: output, shape index: {}]
  %s4 = sld [smem:[#allocation0]]
  $region38: #{tpu_custom_call.1} parent=0
    _
  %s6 = ssub.s32 1, %s4
  %s7 = scalar_select 0, %s6, %s4
  $region1: #{tpu_custom_call.1} parent=0
    #allocation2 [shape = 'u8[4096]{0}', space=vmem, size = 0x1000, scoped, tag = 'input window, operand 1, single buffered']
    #allocation3 [shape = 's32[1]{0}', space=sflag, size = 0x4, scoped, tag = 'scoped memory for tpu_custom_call.1']
    %8 = vsyncpa [#allocation3], 0
    // Predicated region
    $region2: #{tpu_custom_call.1} parent=1 // pred_check
      _
    $region3: #{tpu_custom_call.1} parent=1 // pred_check_branch
      %10 = sbr.rel (0) target = $region5
    $region4: #{tpu_custom_call.1} parent=1 // pred_region
      %s11 = sadd.s32 0, 0
      %p12 = scmp.lt.s32.totalorder %s11, 0
      %s13 = scalar_select %p12, %s11, 0
      %p14 = scmp.lt.s32.totalorder %s13, 0
      %s15 = scalar_select %p14, %s13, 0
      %s16 = smul.addr %s15, 8
      %s17 = scalar_lea.vmem %s0, %s16
      %s18 = sadd.s32 0, 0
      %p19 = scmp.lt.s32.totalorder %s18, 0
      %s20 = scalar_select %p19, %s18, 0
    $region5: #{tpu_custom_call.1} parent=1 // pred_fallthru
      _
    // Predicated region
    $region6: #{tpu_custom_call.1} parent=1 // pred_check
      _
    $region7: #{tpu_custom_call.1} parent=1 // pred_check_branch
      %22 = sbr.rel (0) target = $region9
    $region8: #{tpu_custom_call.1} parent=1 // pred_region
      %s23 = sadd.s32 0, 0
      %p24 = scmp.lt.s32.totalorder %s23, 0
      %s25 = scalar_select %p24, %s23, 0
      %s27 = ssub.s32 128, 128
      %28 = vsyncadd [#allocation3], %s27
      %s29 = smul.addr %s25, 128
      %s30 = scalar_lea.hbm %s1, %s29
      %s32 = sshll.u32 [#allocation2], 4
      %s33 = int_to_ptr.vmem [resolvable:$true] %s32
      %35 = dma.hbm_to_vmem [thread:$0]  %s30, 128, %s33, [#allocation3]
    $region9: #{tpu_custom_call.1} parent=1 // pred_fallthru
      _
    // Predicated region
    $region10: #{tpu_custom_call.1} parent=1 // pred_check
      _
    $region11: #{tpu_custom_call.1} parent=1 // pred_check_branch
      %37 = sbr.rel (0) target = $region13
    $region12: #{tpu_custom_call.1} parent=1 // pred_region
      %s38 = sadd.s32 0, 0
      %p39 = scmp.lt.s32.totalorder %s38, 0
      %s40 = scalar_select %p39, %s38, 0
      %p41 = scmp.lt.s32.totalorder %s40, 0
      %s42 = scalar_select %p41, %s40, 0
      %s43 = smul.addr %s42, 8
      %s44 = scalar_lea.vmem %s2, %s43
      %s45 = sadd.s32 0, 0
      %p46 = scmp.lt.s32.totalorder %s45, 0
      %s47 = scalar_select %p46, %s45, 0
    $region13: #{tpu_custom_call.1} parent=1 // pred_fallthru
      _
    // Predicated region
    $region14: #{tpu_custom_call.1} parent=1 // pred_check
      _
    $region15: #{tpu_custom_call.1} parent=1 // pred_check_branch
      %49 = sbr.rel (0) target = $region17
    $region16: #{tpu_custom_call.1} parent=1 // pred_region
      %50 = dma.done [#allocation3], 128
    $region17: #{tpu_custom_call.1} parent=1 // pred_fallthru
      _
    %s51 = sadd.s32 0, 0
    %p52 = scmp.lt.s32.totalorder %s51, 0
    %s53 = scalar_select %p52, %s51, 0
    %p54 = scmp.lt.s32.totalorder %s53, 0
    %s55 = scalar_select %p54, %s53, 0
    %s56 = smul.addr %s55, 8
    %s57 = scalar_lea.vmem %s0, %s56
    %s58 = sadd.s32 0, 0
    %p59 = scmp.lt.s32.totalorder %s58, 0
    %s60 = scalar_select %p59, %s58, 0
    %p61 = scmp.lt.s32.totalorder %s60, 0
    %s62 = scalar_select %p61, %s60, 0
    %s63 = smul.addr %s62, 8
    %s64 = scalar_lea.vmem %s2, %s63
    %s65 = sadd.s32 0, 0
    %p66 = scmp.lt.s32.totalorder %s65, 0
    %s67 = scalar_select %p66, %s65, 0
    %p68 = scmp.lt.s32.totalorder %s67, 0
    %s69 = scalar_select %p68, %s67, 0
    %s70 = smul.addr %s69, 8
    %s71 = scalar_lea.vmem %s0, %s70
    %s72 = sadd.s32 0, 0
    %p73 = scmp.lt.s32.totalorder %s72, 0
    %s74 = scalar_select %p73, %s72, 0
    %s75 = sadd.s32 0, 0
    %p76 = scmp.lt.s32.totalorder %s75, 0
    %s77 = scalar_select %p76, %s75, 0
    %s78 = sadd.s32 0, 0
    %p79 = scmp.lt.s32.totalorder %s78, 0
    %s80 = scalar_select %p79, %s78, 0
    %p81 = scmp.lt.s32.totalorder %s80, 0
    %s82 = scalar_select %p81, %s80, 0
    %s83 = smul.addr %s82, 8
    %s84 = scalar_lea.vmem %s2, %s83
    %s85 = sadd.s32 0, 0
    %p86 = scmp.lt.s32.totalorder %s85, 0
    %s87 = scalar_select %p86, %s85, 0
    %s88 = sadd.s32 0, 0
    %p89 = scmp.eq.s32.totalorder 0, 0
    // Predicated region
    $region18: #{tpu_custom_call.1} parent=1 // pred_check
      %p90 = pneg %p89
    $region19: #{tpu_custom_call.1} parent=1 // pred_check_branch
      %92 = sbr.rel (%p90) target = $region21
    $region20: #{tpu_custom_call.1} parent=1 // pred_region
      %vm93 = vcmask 7168
      %94 = vst.msk [vmem:[%s3] sm:$0xff] %vm93, 0.0
    $region21: #{tpu_custom_call.1} parent=1 // pred_fallthru
      _
    %v95 = vld [vmem:[%s71] sm:$0xff]
    %v96 = vld [vmem:[#allocation2] sm:$0xff]
    %v97 = vld [vmem:[%s84] sm:$0xff]
    %v98 = vsub.f32 %v95, %v96
    %v99 = vadd.f32 %v98, 1e-06
    %v100 = vmul.f32 %v99, %v99
    %vm101 = vcmask 261120
    %v102 = vsel %vm101, %v100, 0.0
    %103 = vadd.xlane.f32.xlu0 %v102
    %v104 = vpop.xlane.xlu0 %103
    %v105 = vrsqrt.pop %v104
    %v106 = vmul.f32 %v104, %v105
    %vm107 = vcmp.eq.f32.partialorder %v104, inf
    %v108 = vsel %vm107, %v104, %v106
    %vm109 = vcmp.eq.f32.partialorder %v104, 0.0
    %v110 = vand.u32 %v104, 2147483648
    %v111 = vsel %vm109, %v110, %v108
    %v112 = vmul.f32 %v97, %v104
    %v113 = vsub.f32 1.0, %v97
    %v114 = vsub.f32 1.0, %v111
    %v115 = vmax.f32 %v114, 0.0
    %v116 = vmul.f32 %v115, %v115
    %v117 = vmul.f32 %v113, %v116
    %v118 = vadd.f32 %v112, %v117
    %p119 = scmp.lt.s32.totalorder %s88, 0
    // Predicated region
    $region22: #{tpu_custom_call.1} parent=1 // pred_check
      %p120 = pneg %p119
    $region23: #{tpu_custom_call.1} parent=1 // pred_check_branch
      %122 = sbr.rel (%p120) target = $region25
    $region24: #{tpu_custom_call.1} parent=1 // pred_region
      %v123 = vld [vmem:[%s3] sm:$0xff]
      %v124 = vadd.f32 %v123, %v118
      %vm125 = vcmask 7168
      %126 = vst.msk [vmem:[%s3] sm:$0xff] %vm125, %v124
    $region25: #{tpu_custom_call.1} parent=1 // pred_fallthru
      _
    %p127 = scmp.ge.s32.totalorder %s88, 0
    // Predicated region
    $region26: #{tpu_custom_call.1} parent=1 // pred_check
      %p128 = pneg %p127
    $region27: #{tpu_custom_call.1} parent=1 // pred_check_branch
      %130 = sbr.rel (%p128) target = $region29
    $region28: #{tpu_custom_call.1} parent=1 // pred_region
      %s131 = smul.u32 %s88, 8
      %v132 = vlaneseq
      %v133 = vshrl.u32 %v132, 7
      %v134 = vstv %s131
      %v135 = vadd.s32 %v134, %v133
      %v136 = vld [vmem:[%s3] sm:$0xff]
      %vm137 = vcmp.lt.s32.totalorder %v135, 8
      %v138 = vsel %vm137, %v118, 0.0
      %v139 = vadd.f32 %v136, %v138
      %vm140 = vcmask 7168
      %141 = vst.msk [vmem:[%s3] sm:$0xff] %vm140, %v139
    $region29: #{tpu_custom_call.1} parent=1 // pred_fallthru
      _
    // Predicated region
    $region30: #{tpu_custom_call.1} parent=1 // pred_check
      _
    $region31: #{tpu_custom_call.1} parent=1 // pred_check_branch
      %143 = sbr.rel (0) target = $region33
    $region32: #{tpu_custom_call.1} parent=1 // pred_region
      _
    $region33: #{tpu_custom_call.1} parent=1 // pred_fallthru
      _
    // Predicated region
    $region34: #{tpu_custom_call.1} parent=1 // pred_check
      _
    $region35: #{tpu_custom_call.1} parent=1 // pred_check_branch
      %145 = sbr.rel (0) target = $region37
    $region36: #{tpu_custom_call.1} parent=1 // pred_region
      _
    $region37: #{tpu_custom_call.1} parent=1 // pred_fallthru
      _
    %146 = vsyncpa [#allocation3], 1

</llo_original>
